<compile_context>
chip_gen: v5e
topology: v5e:2x2
jax: 0.10.0
libtpu: 0.0.40
codegen_flags: <defaults>
</compile_context>

<pallas_src>
import jax
import jax.numpy as jnp
from jax.experimental import pallas as pl
from jax.experimental.pallas import tpu as pltpu


def _hardswish_kernel(x_ref, o_ref):
    x = x_ref[...]
    # hardswish(x) = x * relu6(x + 3) / 6  ==  x * clip(x/6 + 0.5, 0, 1)
    # (folded 1/6 into the clip: one fewer VPU multiply per element)
    o_ref[...] = x * jnp.clip(x * (1.0 / 6.0) + 0.5, 0.0, 1.0)


_LANE = 128
# minimum sublane tile depends on element width (f32: 8, bf16: 16, int8/fp8: 32)
_SUBLANE_FOR_ITEMSIZE = {4: 8, 2: 16, 1: 32}


def hardswish(x: jax.Array, *, target_block_bytes: int = 2 * 1024 * 1024) -> jax.Array:
    """Elementwise HardSwish, matching torch: x * relu6(x + 3) / 6."""
    orig_shape = x.shape
    dtype = x.dtype
    itemsize = jnp.dtype(dtype).itemsize
    min_sub = _SUBLANE_FOR_ITEMSIZE.get(itemsize, 8)
    min_tile = min_sub * _LANE

    n = x.size
    if n == 0:
        return x

    flat = jnp.ravel(x)  # metadata-only for contiguous input

    # Pad ONLY when necessary, and only to the minimum dtype tile (not to a
    # full block) -- Pallas masks the final partial block via cdiv grid.
    n_pad = pl.cdiv(n, min_tile) * min_tile
    padded = n_pad != n
    if padded:
        flat = jnp.pad(flat, (0, n_pad - n))

    # Lane-dense slab: widest W (multiple of 128, capped at 2048) dividing n_pad
    # -> full unmasked vector stores and long contiguous DMAs.
    W = _LANE
    for cand in (2048, 1024, 512, 256, 128):
        if n_pad % cand == 0:
            W = cand
            break
    rows = n_pad // W

    # ~2 MiB blocks (block_rows a multiple of the sublane tile); for small
    # inputs this collapses to a single grid step over the whole array.
    block_rows = max(min_sub,
                     (target_block_bytes // (W * itemsize)) // min_sub * min_sub)
    block_rows = min(block_rows, rows)

    grid = (pl.cdiv(rows, block_rows),)
    x2d = flat.reshape(rows, W)

    out2d = pl.pallas_call(
        _hardswish_kernel,
        out_shape=jax.ShapeDtypeStruct((rows, W), dtype),
        grid_spec=pltpu.PrefetchScalarGridSpec(
            num_scalar_prefetch=0,
            grid=grid,
            in_specs=[pl.BlockSpec((block_rows, W), lambda i: (i, 0))],
            out_specs=pl.BlockSpec((block_rows, W), lambda i: (i, 0)),
        ),
        compiler_params=pltpu.CompilerParams(
            dimension_semantics=("parallel",),  # megacore split on v7x; no-op on v5e/v6e
        ),
    )(x2d)

    out = out2d.reshape(-1)
    if padded:
        out = out[:n]
    return out.reshape(orig_shape)


def hardswish_ref(x):
    return x * jnp.clip(x + 3.0, 0.0, 6.0) / 6.0


if __name__ == "__main__":
    key = jax.random.PRNGKey(0)
    # NCHW, small shapes consistent with the module usage in MobileNetV3
    x = jax.random.normal(key, (2, 4, 16, 16), dtype=jnp.float32) * 4.0

    y = jax.block_until_ready(hardswish(x))
    y_ref = hardswish_ref(x)

    assert y.shape == x.shape and y.dtype == x.dtype
    assert jnp.allclose(y, y_ref, atol=1e-6, rtol=1e-5), "mismatch vs reference"

    print("KERNEL_OK")
</pallas_src>

<mosaic_0001>
module attributes {stable_mosaic.version = 11 : i64} {
  func.func @_hardswish_kernel(%arg0: i32, %arg1: memref<1x2048xf32, #tpu.memory_space<vmem>>, %arg2: memref<1x2048xf32, #tpu.memory_space<vmem>>) attributes {dimension_semantics = [#tpu.dimension_semantics<parallel>], iteration_bounds = array<i64: 1>, scalar_prefetch = 0 : i64, scratch_operands = 0 : i64, tpu.core_type = #tpu.core_type<tc>, window_params = [{transform_indices = @transform_0, window_bounds = array<i64: 1, 2048>}, {transform_indices = @transform_1, window_bounds = array<i64: 1, 2048>}]} {
    %c0 = arith.constant 0 : index
    %c0_0 = arith.constant 0 : index
    %0 = vector.load %arg1[%c0, %c0_0] : memref<1x2048xf32, #tpu.memory_space<vmem>>, vector<1x2048xf32>
    %cst = arith.constant 0.166666672 : f32
    %1 = vector.broadcast %cst : f32 to vector<1x2048xf32>
    %2 = arith.mulf %0, %1 : vector<1x2048xf32>
    %cst_1 = arith.constant 5.000000e-01 : f32
    %3 = vector.broadcast %cst_1 : f32 to vector<1x2048xf32>
    %4 = arith.addf %2, %3 : vector<1x2048xf32>
    %cst_2 = arith.constant 0.000000e+00 : f32
    %cst_3 = arith.constant 1.000000e+00 : f32
    %5 = vector.broadcast %cst_2 : f32 to vector<1x2048xf32>
    %6 = arith.maximumf %5, %4 : vector<1x2048xf32>
    %7 = vector.broadcast %cst_3 : f32 to vector<1x2048xf32>
    %8 = arith.minimumf %7, %6 : vector<1x2048xf32>
    %9 = arith.mulf %0, %8 : vector<1x2048xf32>
    %c0_4 = arith.constant 0 : index
    %c0_5 = arith.constant 0 : index
    %10 = vector.load %arg2[%c0_4, %c0_5] : memref<1x2048xf32, #tpu.memory_space<vmem>>, vector<1x2048xf32>
    tpu.vector_store %arg2[%c0_4, %c0_5], %9 {strides = array<i32>} : memref<1x2048xf32, #tpu.memory_space<vmem>>, vector<1x2048xf32>,
    return
  }
  func.func @transform_0(%arg0: i32) -> (i32, i32) {
    %c0_i32 = arith.constant 0 : i32
    %c0_i32_0 = arith.constant 0 : i32
    return %arg0, %c0_i32 : i32, i32
  }
  func.func @transform_1(%arg0: i32) -> (i32, i32) {
    %c0_i32 = arith.constant 0 : i32
    %c0_i32_0 = arith.constant 0 : i32
    return %arg0, %c0_i32 : i32, i32
  }
}

</mosaic_0001>

<llo_original>
// kernel: tpu_custom_call.1
$region0: #{tpu_custom_call.1}
  #allocation0 [shape = 'u32[]', space=smem, size = 0x4, offset = 0x4, fixed_abs, tag = 'smem constant byte address 0x4 - core index']
  #allocation1 [shape = 'u32[72,128]{1,0:T(1,128)}', space=vmem, size = 0x9000, scoped, tag = 'internal scratch']
  %s0 = inlined_call_operand.hbm [shape: f32[1,2048], index: 0, kind: input, shape index: {}]
  %s1 = inlined_call_operand.hbm [shape: f32[1,2048], index: 1, kind: output, shape index: {}]
  %s2 = sld [smem:[#allocation0]]
  $region18: #{tpu_custom_call.1} parent=0
    _
  %s4 = ssub.s32 1, %s2
  %s5 = scalar_select 0, %s4, %s2
  $region1: #{tpu_custom_call.1} parent=0
    #allocation2 [shape = 'u8[8192]{0}', space=vmem, size = 0x2000, scoped, tag = 'input window, operand 0, single buffered']
    #allocation3 [shape = 's32[1]{0}', space=sflag, size = 0x4, scoped, tag = 'scoped memory for tpu_custom_call.1']
    #allocation4 [shape = 's32[1]{0}', space=sflag, size = 0x4, scoped, tag = 'scoped memory for tpu_custom_call.1']
    #allocation5 [shape = 'u8[8192]{0}', space=vmem, size = 0x2000, scoped, tag = 'output window, operand 0, single buffered']
    %6 = vsyncpa [#allocation3], 0
    %7 = vsyncpa [#allocation4], 0
    // Predicated region
    $region2: #{tpu_custom_call.1} parent=1 // pred_check
      _
    $region3: #{tpu_custom_call.1} parent=1 // pred_check_branch
      %9 = sbr.rel (0) target = $region5
    $region4: #{tpu_custom_call.1} parent=1 // pred_region
      %11 = vsyncadd [#allocation3], 0
      %s13 = sshll.u32 %s0, 4
      %s14 = int_to_ptr.hbm [resolvable:$true] %s13
      %s15 = sshll.u32 [#allocation2], 4
      %s16 = int_to_ptr.vmem [resolvable:$true] %s15
      %18 = dma.hbm_to_vmem [thread:$0]  %s14, 256, %s16, [#allocation3]
    $region5: #{tpu_custom_call.1} parent=1 // pred_fallthru
      _
    // Predicated region
    $region6: #{tpu_custom_call.1} parent=1 // pred_check
      _
    $region7: #{tpu_custom_call.1} parent=1 // pred_check_branch
      %20 = sbr.rel (0) target = $region9
    $region8: #{tpu_custom_call.1} parent=1 // pred_region
      %22 = dma.done [#allocation3], 256
    $region9: #{tpu_custom_call.1} parent=1 // pred_fallthru
      _
    %v23 = vld [vmem:[#allocation2] sm:$0xff]
    %v24 = vld [vmem:[#allocation2 + $0x8] sm:$0xff]
    %v25 = vmul.f32 %v23, 0.16666667
    %v26 = vmul.f32 %v24, 0.16666667
    %v27 = vadd.f32 %v25, 0.5
    %v28 = vadd.f32 %v26, 0.5
    %v29 = vmax.f32 %v27, 0.0
    %v30 = vmax.f32 %v28, 0.0
    %v31 = vmin.f32 %v29, 1.0
    %v32 = vmin.f32 %v30, 1.0
    %v33 = vmul.f32 %v23, %v31
    %v34 = vmul.f32 %v24, %v32
    %35 = vst [vmem:[#allocation5] sm:$0xff] %v33
    %36 = vst [vmem:[#allocation5 + $0x8] sm:$0xff] %v34
    // Predicated region
    $region10: #{tpu_custom_call.1} parent=1 // pred_check
      _
    $region11: #{tpu_custom_call.1} parent=1 // pred_check_branch
      %38 = sbr.rel (0) target = $region13
    $region12: #{tpu_custom_call.1} parent=1 // pred_region
      %40 = vsyncadd [#allocation4], 0
      %s42 = sshll.u32 [#allocation5], 4
      %s43 = int_to_ptr.vmem [resolvable:$true] %s42
      %s44 = sshll.u32 %s1, 4
      %s45 = int_to_ptr.hbm [resolvable:$true] %s44
      %47 = dma.vmem_to_hbm [thread:$0]  %s43, 256, %s45, [#allocation4]
    $region13: #{tpu_custom_call.1} parent=1 // pred_fallthru
      _
    // Predicated region
    $region14: #{tpu_custom_call.1} parent=1 // pred_check
      _
    $region15: #{tpu_custom_call.1} parent=1 // pred_check_branch
      %49 = sbr.rel (0) target = $region17
    $region16: #{tpu_custom_call.1} parent=1 // pred_region
      %51 = dma.done [#allocation4], 256
    $region17: #{tpu_custom_call.1} parent=1 // pred_fallthru
      _
    %52 = vsyncpa [#allocation3], 1
    %53 = vsyncpa [#allocation4], 1

</llo_original>
